<compile_context>
chip_gen: v5e
topology: v5e:2x2
jax: 0.10.0
libtpu: 0.0.40
codegen_flags: <defaults>
</compile_context>

<pallas_src>
import functools

import jax
import jax.numpy as jnp
from jax import lax
from jax.experimental import pallas as pl
from jax.experimental.pallas import tpu as pltpu


def _round_up(n, m):
    return ((n + m - 1) // m) * m


def _cdiv(a, b):
    return (a + b - 1) // b


def _mlp_kernel(x_ref, w1_ref, b1_ref, w2_ref, b2_ref, ot_ref, *, act_dtype):
    # x_ref : (TILE_B, in)   natural batch-major layout (no wrapper transpose)
    # w1_ref: (hidden, in)   b1_ref: (hidden, 1)
    # w2_ref: (out, hidden)  b2_ref: (out, 1)
    # ot_ref: (out, TILE_B)  feature-major -> lane-dense output stores
    #
    # Layer 1: contract the feature axis of both operands on the MXU; result
    # is (hidden, TILE_B) with batch on the 128-lane axis.
    z1 = lax.dot_general(
        w1_ref[...], x_ref[...],
        dimension_numbers=(((1,), (1,)), ((), ())),
        preferred_element_type=jnp.float32,
    ) + b1_ref[...]
    # EUP transcendental: bf16 on v6e/v7x (~2x rate), f32 on v5e.
    h = jnp.tanh(z1.astype(act_dtype))
    # Layer 2: (out, hidden) @ (hidden, TILE_B) -> (out, TILE_B), f32 accum.
    z2 = jnp.dot(
        w2_ref[...].astype(act_dtype), h, preferred_element_type=jnp.float32
    ) + b2_ref[...]
    ot_ref[...] = jax.nn.sigmoid(z2).astype(ot_ref.dtype)


def _pick_act_dtype():
    # bf16 EUP/VPU exists on v6e / v7x; keep v5e (and older) on the f32 path.
    try:
        kind = jax.devices()[0].device_kind.lower()
    except Exception:
        return jnp.float32
    if any(tag in kind for tag in ("v2", "v3", "v4", "v5")):
        return jnp.float32
    return jnp.bfloat16


@functools.partial(jax.jit, static_argnames=("act_dtype", "max_tile_b"))
def _forward(x, w1, b1, w2, b2, *, act_dtype, max_tile_b):
    B, in_size = x.shape
    hidden = w1.shape[0]
    out_size = w2.shape[0]

    # Batch tile: multiple of 128 so the lane axis stays fully dense.
    # No batch padding: the last grid tile may be ragged (OOB reads padded,
    # OOB writes masked; per-column math means no cross-contamination).
    b_ceil = _round_up(B, 128)
    tile_b = min(max_tile_b, b_ceil)
    if _cdiv(b_ceil, tile_b) < 2 and b_ceil >= 256:
        # Keep >= 2 grid steps so ("parallel",) can shard the batch axis
        # across both TensorCores on v7x (harmless on 1-TC chips).
        tile_b = _round_up(_cdiv(b_ceil, 2), 128)
    grid = (_cdiv(B, tile_b),)

    kernel = functools.partial(_mlp_kernel, act_dtype=act_dtype)

    out_t = pl.pallas_call(
        kernel,
        out_shape=jax.ShapeDtypeStruct((out_size, B), jnp.float32),
        grid=grid,
        in_specs=[
            # activations: new batch tile per grid step (double-buffered)
            pl.BlockSpec((tile_b, in_size), lambda i: (i, 0)),
            # weights & biases: constant index_map -> loaded once, VMEM-resident
            pl.BlockSpec((hidden, in_size), lambda i: (0, 0)),
            pl.BlockSpec((hidden, 1), lambda i: (0, 0)),
            pl.BlockSpec((out_size, hidden), lambda i: (0, 0)),
            pl.BlockSpec((out_size, 1), lambda i: (0, 0)),
        ],
        out_specs=pl.BlockSpec((out_size, tile_b), lambda i: (0, i)),
        compiler_params=pltpu.CompilerParams(
            dimension_semantics=("parallel",),       # megacore sharding on v7x
            vmem_limit_bytes=32 * 1024 * 1024,       # ample headroom everywhere
        ),
    )(x, w1, b1, w2, b2)

    # Tiny (out, B) -> (B, out) transpose back to the torch convention.
    return out_t.T


def model1_forward(x, w1, b1, w2, b2, *, act_dtype=None, max_tile_b=8192):
    """x: (B, in); w1: (hidden, in); b1: (hidden, 1); w2: (out, hidden);
       b2: (out, 1).  Returns (B, out) float32."""
    if act_dtype is None:
        act_dtype = _pick_act_dtype()
    return _forward(x, w1, b1, w2, b2, act_dtype=act_dtype, max_tile_b=max_tile_b)


def init_params(key, in_size, hidden_size, out_size):
    """Deterministic init mimicking nn.Linear's uniform(-1/sqrt(fan_in), +).
       Weights in torch layout (out_feat, in_feat); biases as (feat, 1)."""
    k1, k2, k3, k4 = jax.random.split(key, 4)
    lim1 = 1.0 / (in_size ** 0.5)
    lim2 = 1.0 / (hidden_size ** 0.5)
    w1 = jax.random.uniform(k1, (hidden_size, in_size), jnp.float32, -lim1, lim1)
    b1 = jax.random.uniform(k2, (hidden_size, 1), jnp.float32, -lim1, lim1)
    w2 = jax.random.uniform(k3, (out_size, hidden_size), jnp.float32, -lim2, lim2)
    b2 = jax.random.uniform(k4, (out_size, 1), jnp.float32, -lim2, lim2)
    return w1, b1, w2, b2


def _reference(x, w1, b1, w2, b2):
    # Pure-JAX f32 reference of the same math (torch layout: y = x @ W^T + b).
    h = jnp.tanh(x @ w1.T + b1.reshape(1, -1))
    return jax.nn.sigmoid(h @ w2.T + b2.reshape(1, -1))


if __name__ == "__main__":
    key = jax.random.PRNGKey(0)
    kx, kp, kx2 = jax.random.split(key, 3)

    # Small shapes consistent with the Duffing-oscillator MLP.
    batch, in_size, hidden_size, out_size = 8, 4, 32, 2
    w1, b1, w2, b2 = init_params(kp, in_size, hidden_size, out_size)

    # --- small batch, forced f32 path, single (ragged) tile: exact check ---
    x = jax.random.normal(kx, (batch, in_size), jnp.float32)
    out = jax.block_until_ready(
        model1_forward(x, w1, b1, w2, b2, act_dtype=jnp.float32))
    ref = _reference(x, w1, b1, w2, b2)
    assert out.shape == (batch, out_size)
    assert jnp.allclose(out, ref, atol=1e-5, rtol=1e-5)

    # --- larger batch: multi-tile grid, ragged last tile, megacore split,
    #     hardware-default transcendental dtype (bf16 on v6e/v7x, f32 on v5e) ---
    big_batch = 2500  # tile 1280, grid=(2,), second tile ragged (no padding)
    x2 = jax.random.normal(kx2, (big_batch, in_size), jnp.float32)
    act_dtype = _pick_act_dtype()
    out2 = jax.block_until_ready(model1_forward(x2, w1, b1, w2, b2))
    ref2 = _reference(x2, w1, b1, w2, b2)
    assert out2.shape == (big_batch, out_size)
    tol = 1e-5 if act_dtype == jnp.float32 else 1e-2
    assert jnp.allclose(out2, ref2, atol=tol, rtol=tol)

    print("KERNEL_OK")
</pallas_src>

<mosaic_0001>
module attributes {stable_mosaic.version = 11 : i64} {
  func.func @_mlp_kernel(%arg0: i32, %arg1: memref<128x4xf32, #tpu.memory_space<vmem>>, %arg2: memref<32x4xf32, #tpu.memory_space<vmem>>, %arg3: memref<32x1xf32, #tpu.memory_space<vmem>>, %arg4: memref<2x32xf32, #tpu.memory_space<vmem>>, %arg5: memref<2x1xf32, #tpu.memory_space<vmem>>, %arg6: memref<2x128xf32, #tpu.memory_space<vmem>>) attributes {dimension_semantics = [#tpu.dimension_semantics<parallel>], iteration_bounds = array<i64: 1>, scalar_prefetch = 0 : i64, scratch_operands = 0 : i64, tpu.core_type = #tpu.core_type<tc>, window_params = [{transform_indices = @transform_0, window_bounds = array<i64: 128, 4>}, {pipeline_mode = #tpu.pipeline_mode<synchronous>, transform_indices = @transform_1, window_bounds = array<i64: 32, 4>}, {pipeline_mode = #tpu.pipeline_mode<synchronous>, transform_indices = @transform_2, window_bounds = array<i64: 32, 1>}, {pipeline_mode = #tpu.pipeline_mode<synchronous>, transform_indices = @transform_3, window_bounds = array<i64: 2, 32>}, {pipeline_mode = #tpu.pipeline_mode<synchronous>, transform_indices = @transform_4, window_bounds = array<i64: 2, 1>}, {transform_indices = @transform_5, window_bounds = array<i64: 2, 128>}]} {
    %c0 = arith.constant 0 : index
    %c0_0 = arith.constant 0 : index
    %0 = vector.load %arg2[%c0, %c0_0] : memref<32x4xf32, #tpu.memory_space<vmem>>, vector<32x4xf32>
    %c0_1 = arith.constant 0 : index
    %c0_2 = arith.constant 0 : index
    %1 = vector.load %arg1[%c0_1, %c0_2] : memref<128x4xf32, #tpu.memory_space<vmem>>, vector<128x4xf32>
    %cst = arith.constant dense<0.000000e+00> : vector<32x128xf32>
    %2 = tpu.matmul %0, %1, %cst {dimension_numbers = #tpu.dot_dimension_numbers<[1], [1], [0], [0], [0, 0, 1, 0], [], []>} : vector<32x4xf32>, vector<128x4xf32>, vector<32x128xf32> -> vector<32x128xf32>
    %c0_3 = arith.constant 0 : index
    %c0_4 = arith.constant 0 : index
    %3 = vector.load %arg3[%c0_3, %c0_4] : memref<32x1xf32, #tpu.memory_space<vmem>>, vector<32x1xf32>
    %4 = vector.broadcast %3 : vector<32x1xf32> to vector<32x128xf32>
    %5 = arith.addf %2, %4 : vector<32x128xf32>
    %6 = math.tanh %5 : vector<32x128xf32>
    %c0_5 = arith.constant 0 : index
    %c0_6 = arith.constant 0 : index
    %7 = vector.load %arg4[%c0_5, %c0_6] : memref<2x32xf32, #tpu.memory_space<vmem>>, vector<2x32xf32>
    %cst_7 = arith.constant dense<0.000000e+00> : vector<2x128xf32>
    %8 = tpu.matmul %7, %6, %cst_7 {dimension_numbers = #tpu.dot_dimension_numbers<[1], [0], [0], [1], [0, 0, 1, 1], [], []>} : vector<2x32xf32>, vector<32x128xf32>, vector<2x128xf32> -> vector<2x128xf32>
    %c0_8 = arith.constant 0 : index
    %c0_9 = arith.constant 0 : index
    %9 = vector.load %arg5[%c0_8, %c0_9] : memref<2x1xf32, #tpu.memory_space<vmem>>, vector<2x1xf32>
    %10 = vector.broadcast %9 : vector<2x1xf32> to vector<2x128xf32>
    %11 = arith.addf %8, %10 : vector<2x128xf32>
    %12 = arith.negf %11 : vector<2x128xf32>
    %13 = math.exp %12 : vector<2x128xf32>
    %cst_10 = arith.constant 1.000000e+00 : f32
    %14 = vector.broadcast %cst_10 : f32 to vector<2x128xf32>
    %15 = arith.addf %14, %13 : vector<2x128xf32>
    %16 = arith.divf %14, %15 : vector<2x128xf32>
    %c0_11 = arith.constant 0 : index
    %c0_12 = arith.constant 0 : index
    %17 = vector.load %arg6[%c0_11, %c0_12] : memref<2x128xf32, #tpu.memory_space<vmem>>, vector<2x128xf32>
    tpu.vector_store %arg6[%c0_11, %c0_12], %16 {strides = array<i32>} : memref<2x128xf32, #tpu.memory_space<vmem>>, vector<2x128xf32>,
    return
  }
  func.func @transform_0(%arg0: i32) -> (i32, i32) {
    %c0_i32 = arith.constant 0 : i32
    %c0_i32_0 = arith.constant 0 : i32
    return %arg0, %c0_i32 : i32, i32
  }
  func.func @transform_1(%arg0: i32) -> (i32, i32) {
    %c0_i32 = arith.constant 0 : i32
    %c0_i32_0 = arith.constant 0 : i32
    %c0_i32_1 = arith.constant 0 : i32
    return %c0_i32, %c0_i32_0 : i32, i32
  }
  func.func @transform_2(%arg0: i32) -> (i32, i32) {
    %c0_i32 = arith.constant 0 : i32
    %c0_i32_0 = arith.constant 0 : i32
    %c0_i32_1 = arith.constant 0 : i32
    return %c0_i32, %c0_i32_0 : i32, i32
  }
  func.func @transform_3(%arg0: i32) -> (i32, i32) {
    %c0_i32 = arith.constant 0 : i32
    %c0_i32_0 = arith.constant 0 : i32
    %c0_i32_1 = arith.constant 0 : i32
    return %c0_i32, %c0_i32_0 : i32, i32
  }
  func.func @transform_4(%arg0: i32) -> (i32, i32) {
    %c0_i32 = arith.constant 0 : i32
    %c0_i32_0 = arith.constant 0 : i32
    %c0_i32_1 = arith.constant 0 : i32
    return %c0_i32, %c0_i32_0 : i32, i32
  }
  func.func @transform_5(%arg0: i32) -> (i32, i32) {
    %c0_i32 = arith.constant 0 : i32
    %c0_i32_0 = arith.constant 0 : i32
    return %c0_i32, %arg0 : i32, i32
  }
}

</mosaic_0001>

<llo_original>
// kernel: _forward.1
$region0: #{_forward.1}
  #allocation0 [shape = 'u32[]', space=smem, size = 0x4, offset = 0x4, fixed_abs, tag = 'smem constant byte address 0x4 - core index']
  #allocation1 [shape = 'u32[72,128]{1,0:T(1,128)}', space=vmem, size = 0x9000, scoped, tag = 'internal scratch']
  %s0 = inlined_call_operand.vmem [shape: f32[8,4], index: 0, kind: input, shape index: {}]
  %s1 = inlined_call_operand.vmem [shape: f32[32,4], index: 1, kind: input, shape index: {}]
  %s2 = inlined_call_operand.vmem [shape: f32[32,1], index: 2, kind: input, shape index: {}]
  %s3 = inlined_call_operand.vmem [shape: f32[2,32], index: 3, kind: input, shape index: {}]
  %s4 = inlined_call_operand.vmem [shape: f32[2,1], index: 4, kind: input, shape index: {}]
  %s5 = inlined_call_operand.hbm [shape: f32[2,8], index: 5, kind: output, shape index: {}]
  %s6 = sld [smem:[#allocation0]]
  $region30: #{_forward.1} parent=0
    _
  %s8 = ssub.s32 1, %s6
  %s9 = scalar_select 0, %s8, %s6
  $region1: #{_forward.1} parent=0
    #allocation2 [shape = 'u8[1024]{0}', space=vmem, size = 0x400, scoped, tag = 'output window, operand 0, single buffered']
    #allocation3 [shape = 's32[1]{0}', space=sflag, size = 0x4, scoped, tag = 'scoped memory for _forward.1']
    %10 = vsyncpa [#allocation3], 0
    // Predicated region
    $region2: #{_forward.1} parent=1 // pred_check
      _
    $region3: #{_forward.1} parent=1 // pred_check_branch
      %12 = sbr.rel (0) target = $region5
    $region4: #{_forward.1} parent=1 // pred_region
      _
    $region5: #{_forward.1} parent=1 // pred_fallthru
      _
    // Predicated region
    $region6: #{_forward.1} parent=1 // pred_check
      _
    $region7: #{_forward.1} parent=1 // pred_check_branch
      %14 = sbr.rel (0) target = $region9
    $region8: #{_forward.1} parent=1 // pred_region
      _
    $region9: #{_forward.1} parent=1 // pred_fallthru
      _
    // Predicated region
    $region10: #{_forward.1} parent=1 // pred_check
      _
    $region11: #{_forward.1} parent=1 // pred_check_branch
      %16 = sbr.rel (0) target = $region13
    $region12: #{_forward.1} parent=1 // pred_region
      _
    $region13: #{_forward.1} parent=1 // pred_fallthru
      _
    // Predicated region
    $region14: #{_forward.1} parent=1 // pred_check
      _
    $region15: #{_forward.1} parent=1 // pred_check_branch
      %18 = sbr.rel (0) target = $region17
    $region16: #{_forward.1} parent=1 // pred_region
      _
    $region17: #{_forward.1} parent=1 // pred_fallthru
      _
    // Predicated region
    $region18: #{_forward.1} parent=1 // pred_check
      _
    $region19: #{_forward.1} parent=1 // pred_check_branch
      %20 = sbr.rel (0) target = $region21
    $region20: #{_forward.1} parent=1 // pred_region
      _
    $region21: #{_forward.1} parent=1 // pred_fallthru
      _
    %v21 = vld [vmem:[%s1] sm:$0xff]
    %v22 = vld [vmem:[%s1 + $0x8] sm:$0xff]
    %v23 = vld [vmem:[%s1 + $0x10] sm:$0xff]
    %v24 = vld [vmem:[%s1 + $0x18] sm:$0xff]
    %v25 = vld [vmem:[%s0] sm:$0xff]
    %v26 = vld [vmem:[%s0 + $0x8] sm:$0xff]
    %v27 = vld [vmem:[%s0 + $0x10] sm:$0xff]
    %v28 = vld [vmem:[%s0 + $0x18] sm:$0xff]
    %v29 = vld [vmem:[%s0 + $0x20] sm:$0xff]
    %v30 = vld [vmem:[%s0 + $0x28] sm:$0xff]
    %v31 = vld [vmem:[%s0 + $0x30] sm:$0xff]
    %v32 = vld [vmem:[%s0 + $0x38] sm:$0xff]
    %v33 = vld [vmem:[%s0 + $0x40] sm:$0xff]
    %v34 = vld [vmem:[%s0 + $0x48] sm:$0xff]
    %v35 = vld [vmem:[%s0 + $0x50] sm:$0xff]
    %v36 = vld [vmem:[%s0 + $0x58] sm:$0xff]
    %v37 = vld [vmem:[%s0 + $0x60] sm:$0xff]
    %v38 = vld [vmem:[%s0 + $0x68] sm:$0xff]
    %v39 = vld [vmem:[%s0 + $0x70] sm:$0xff]
    %v40 = vld [vmem:[%s0 + $0x78] sm:$0xff]
    %v41 = vld [vmem:[%s2] sm:$0xff]
    %v42 = vld [vmem:[%s2 + $0x8] sm:$0xff]
    %v43 = vld [vmem:[%s2 + $0x10] sm:$0xff]
    %v44 = vld [vmem:[%s2 + $0x18] sm:$0xff]
    %46 = vset.pattern.permute.xlu0 0
    %47 = vperm.xlu0 %46, %v41
    %v48 = vpop.permute.xlu0 %47
    %51 = vset.pattern.permute.xlu0 0
    %52 = vperm.xlu0 %51, %v42
    %v53 = vpop.permute.xlu0 %52
    %56 = vset.pattern.permute.xlu0 0
    %57 = vperm.xlu0 %56, %v43
    %v58 = vpop.permute.xlu0 %57
    %61 = vset.pattern.permute.xlu0 0
    %62 = vperm.xlu0 %61, %v44
    %v63 = vpop.permute.xlu0 %62
    %vm65 = vcmask 31744
    %v67 = vsel %vm65, %v21, 0
    %v70 = vsel %vm65, %v22, 0
    %v73 = vsel %vm65, %v23, 0
    %v76 = vsel %vm65, %v24, 0
    %v79 = vsel %vm65, %v25, 0
    %v82 = vsel %vm65, %v26, 0
    %v85 = vsel %vm65, %v27, 0
    %v88 = vsel %vm65, %v28, 0
    %v91 = vsel %vm65, %v29, 0
    %v94 = vsel %vm65, %v30, 0
    %v97 = vsel %vm65, %v31, 0
    %v100 = vsel %vm65, %v32, 0
    %v103 = vsel %vm65, %v33, 0
    %v106 = vsel %vm65, %v34, 0
    %v109 = vsel %vm65, %v35, 0
    %v112 = vsel %vm65, %v36, 0
    %v115 = vsel %vm65, %v37, 0
    %v118 = vsel %vm65, %v38, 0
    %v121 = vsel %vm65, %v39, 0
    %v124 = vsel %vm65, %v40, 0
    %126 = vmatpush.xpose.msra.mxu0 %v124
    %127 = vmatpush.xpose.msra.mxu0 %v121
    %128 = vmatpush.xpose.msra.mxu0 %v118
    %129 = vmatpush.xpose.msra.mxu0 %v115
    %130 = vmatpush.xpose.msra.mxu0 %v112
    %131 = vmatpush.xpose.msra.mxu0 %v109
    %132 = vmatpush.xpose.msra.mxu0 %v106
    %133 = vmatpush.xpose.msra.mxu0 %v103
    %134 = vmatpush.xpose.msra.mxu0 %v100
    %135 = vmatpush.xpose.msra.mxu0 %v97
    %136 = vmatpush.xpose.msra.mxu0 %v94
    %137 = vmatpush.xpose.msra.mxu0 %v91
    %138 = vmatpush.xpose.msra.mxu0 %v88
    %139 = vmatpush.xpose.msra.mxu0 %v85
    %140 = vmatpush.xpose.msra.mxu0 %v82
    %141 = vmatpush.xpose.msra.mxu0 %v79
    %142 = vmatmul.f32.gmra.mxu0 %v67
    %v143 = vpop.f32.mrf.mxu0
    %v144 = vadd.f32 %v48, %v143
    %145 = vmatmul.f32.gmra.mxu0 %v70
    %v146 = vpop.f32.mrf.mxu0
    %v147 = vadd.f32 %v53, %v146
    %148 = vmatmul.f32.gmra.mxu0 %v73
    %v149 = vpop.f32.mrf.mxu0
    %v150 = vadd.f32 %v58, %v149
    %151 = vmatmul.f32.gmra.mxu0 %v76
    %v152 = vpop.f32.mrf.mxu0
    %v153 = vadd.f32 %v63, %v152
    %154 = vdwg.mxu0
    %v155 = vtanh.pop %v144
    %v156 = vtanh.pop %v147
    %v157 = vtanh.pop %v150
    %v158 = vtanh.pop %v153
    %v159 = vld [vmem:[%s3] sm:$0x3]
    %v160 = vld [vmem:[%s4] sm:$0x3]
    %162 = vset.pattern.permute.xlu0 0
    %163 = vperm.xlu0 %162, %v160
    %v164 = vpop.permute.xlu0 %163
    %vm166 = vcmask 261120
    %v168 = vsel %vm166, %v159, 0
    %170 = vmatpush.msra.mxu0 0.0
    %171 = vmatpush.msra.mxu0 0.0
    %172 = vmatpush.msra.mxu0 0.0
    %173 = vmatpush.msra.mxu0 0.0
    %174 = vmatpush.msra.mxu0 0.0
    %175 = vmatpush.msra.mxu0 0.0
    %176 = vmatpush.msra.mxu0 0.0
    %177 = vmatpush.msra.mxu0 0.0
    %178 = vmatpush.msra.mxu0 0.0
    %179 = vmatpush.msra.mxu0 0.0
    %180 = vmatpush.msra.mxu0 0.0
    %181 = vmatpush.msra.mxu0 0.0
    %182 = vmatpush.msra.mxu0 %v158
    %183 = vmatpush.msra.mxu0 %v157
    %184 = vmatpush.msra.mxu0 %v156
    %185 = vmatpush.msra.mxu0 %v155
    %186 = vmatmul.f32.gmra.mxu0 %v168
    %v187 = vpop.f32.mrf.mxu0
    %v188 = vadd.f32 %v164, %v187
    %189 = vdwg.mxu0
    %v190 = vxor.u32 %v188, 2147483648
    %v191 = vmul.f32 %v190, 1.442695
    %v192 = vpow.pop %v191
    %v193 = vadd.f32 %v192, 1.0
    %v194 = vrcp.pop %v193
    %v195 = vmul.f32 %v193, %v194
    %v196 = vsub.f32 1.0, %v195
    %v197 = vmul.f32 %v194, %v196
    %v198 = vadd.f32 %v194, %v197
    %vm199 = vweird.f32 %v193
    %vm200 = vweird.f32 %v194
    %vm201 = vmor %vm199, %vm200
    %v202 = vsel %vm201, %v194, %v198
    %v203 = vand.u32 2147483647, %v193
    %vm204 = vcmp.eq.f32.partialorder %v203, 8.507059e+37
    %v205 = vand.u32 %v193, 2147483648
    %v206 = vor.u32 1.1754944e-38, %v205
    %v207 = vsel %vm204, %v206, %v202
    %v208 = vmul.f32 1.0, %v207
    %209 = vst [vmem:[#allocation2] sm:$0x3] %v208
    // Predicated region
    $region22: #{_forward.1} parent=1 // pred_check
      _
    $region23: #{_forward.1} parent=1 // pred_check_branch
      %211 = sbr.rel (0) target = $region25
    $region24: #{_forward.1} parent=1 // pred_region
      %213 = vsyncadd [#allocation3], 0
      %s215 = sshll.u32 [#allocation2], 4
      %s216 = int_to_ptr.vmem [resolvable:$true] %s215
      %s217 = sshll.u32 %s5, 4
      %s218 = int_to_ptr.hbm [resolvable:$true] %s217
      %220 = dma.vmem_to_hbm [thread:$0]  %s216, 32, %s218, [#allocation3]
    $region25: #{_forward.1} parent=1 // pred_fallthru
      _
    // Predicated region
    $region26: #{_forward.1} parent=1 // pred_check
      _
    $region27: #{_forward.1} parent=1 // pred_check_branch
      %222 = sbr.rel (0) target = $region29
    $region28: #{_forward.1} parent=1 // pred_region
      %224 = dma.done [#allocation3], 32
    $region29: #{_forward.1} parent=1 // pred_fallthru
      _
    %225 = vsyncpa [#allocation3], 1

</llo_original>
